<compile_context>
chip_gen: v7x
topology: tpu7x:2x2x1
jax: 0.10.0
libtpu: 0.0.40
codegen_flags: <defaults>
</compile_context>

<pallas_src>
import functools

import jax
import jax.numpy as jnp
from jax.experimental import pallas as pl
from jax.experimental.pallas import tpu as pltpu


def head_kernel(x_ref, wqkv_ref, o_ref, *, head_size, scale, compute_dtype):
    # x_ref: (1, T, C) block for one batch element; wqkv_ref: (C, 3H) fused [Wq | Wk | Wv].
    x = x_ref[0]                         # (T, C), already in compute_dtype
    w = wqkv_ref[...]                    # (C, 3H), already in compute_dtype

    # Single fused projection on the MXU, f32 accumulation.
    qkv = jnp.dot(x, w, preferred_element_type=jnp.float32)      # (T, 3H) f32

    H = head_size
    # Fold the (n_embd)**-0.5 scale into q (the (T, H) tensor, not the (T, T) scores).
    q = (qkv[:, 0:H] * scale).astype(compute_dtype)               # (T, H)
    k = qkv[:, H:2 * H].astype(compute_dtype)                     # (T, H)
    v = qkv[:, 2 * H:3 * H].astype(compute_dtype)                 # (T, H)

    # Scores on the MXU, f32 accumulation.
    s = jnp.dot(q, k.T, preferred_element_type=jnp.float32)       # (T, T) f32

    # Causal mask (tril): keep positions where col <= row.  Finite large-negative (not -inf)
    # so a hypothetical fully-masked row would not NaN.
    T = s.shape[0]
    row = jax.lax.broadcasted_iota(jnp.int32, (T, T), 0)
    col = jax.lax.broadcasted_iota(jnp.int32, (T, T), 1)
    s = jnp.where(col <= row, s, jnp.float32(-1e30))

    # Numerically stable softmax, kept in f32 (v5e has no bf16 VALU/EUP).
    m = jnp.max(s, axis=-1, keepdims=True)                        # (T, 1)
    p = jnp.exp(s - m)                                            # (T, T) unnormalized
    l = jnp.sum(p, axis=-1, keepdims=True)                        # (T, 1)

    # TODO(synk): training-mode dropout on attention weights omitted (eval-mode => identity)

    # Apply normalization to the small (T, H) result via an EUP reciprocal + multiply.
    out = jnp.dot(p.astype(compute_dtype), v, preferred_element_type=jnp.float32)  # (T, H)
    out = out * pl.reciprocal(l, approx=True)

    o_ref[0] = out.astype(o_ref.dtype)


def head_forward(x, wk, wq, wv, *, compute_dtype=None):
    """x: (B, T, C); wk/wq/wv: (C, H) (already transposed so kernel does x @ W).

    compute_dtype: dtype of MXU operands (e.g. jnp.bfloat16 on v6e/v7x). Accumulation and
    softmax always run in f32; output dtype matches x.
    """
    B, T, C = x.shape
    H = wk.shape[1]
    cd = compute_dtype if compute_dtype is not None else x.dtype

    # Fuse the three projection weights into one (C, 3H) matrix: [Wq | Wk | Wv].
    w_qkv = jnp.concatenate([wq, wk, wv], axis=1).astype(cd)
    x_in = x.astype(cd)   # halves x HBM traffic when cd == bf16

    kernel = functools.partial(
        head_kernel,
        head_size=H,
        scale=float(C) ** -0.5,    # v2.py scales by n_embd**-0.5, not head_size**-0.5
        compute_dtype=cd,
    )

    return pl.pallas_call(
        kernel,
        out_shape=jax.ShapeDtypeStruct((B, T, H), x.dtype),
        grid_spec=pltpu.PrefetchScalarGridSpec(
            num_scalar_prefetch=0,
            grid=(B,),
            in_specs=[
                pl.BlockSpec((1, T, C), lambda b: (b, 0, 0)),
                pl.BlockSpec((C, 3 * H), lambda b: (0, 0)),
            ],
            out_specs=pl.BlockSpec((1, T, H), lambda b: (b, 0, 0)),
        ),
        compiler_params=pltpu.CompilerParams(
            # Batch axis is independent -> shard across the two TensorCores on v7x.
            dimension_semantics=("parallel",)),
    )(x_in, w_qkv)


def head_reference(x, wk, wq, wv):
    """Pure-JAX reference matching the PyTorch forward (eval mode)."""
    B, T, C = x.shape
    k = x @ wk
    q = x @ wq
    v = x @ wv
    wei = jnp.einsum("btd,bsd->bts", q, k) * (C ** -0.5)
    mask = jnp.tril(jnp.ones((T, T), dtype=bool))
    wei = jnp.where(mask[None], wei, -jnp.inf)
    wei = jax.nn.softmax(wei, axis=-1)
    return jnp.einsum("bts,bsd->btd", wei, v)


if __name__ == "__main__":
    # Shapes consistent with v2.py: n_embd=384, n_head=6 -> head_size=64; seq <= block_size=256.
    B, T = 2, 128
    C = 384
    H = C // 6   # 64

    key = jax.random.PRNGKey(0)
    kx, kk, kq, kv = jax.random.split(key, 4)

    x = jax.random.normal(kx, (B, T, C), dtype=jnp.float32)

    # nn.Linear(n_embd, head_size, bias=False) init: U(-1/sqrt(C), 1/sqrt(C)),
    # stored transposed as (C, H) so the kernel computes x @ W.
    bound = 1.0 / (C ** 0.5)
    wk = jax.random.uniform(kk, (C, H), jnp.float32, -bound, bound)
    wq = jax.random.uniform(kq, (C, H), jnp.float32, -bound, bound)
    wv = jax.random.uniform(kv, (C, H), jnp.float32, -bound, bound)

    ref = head_reference(x, wk, wq, wv)

    # f32 MXU operand path.
    out = head_forward(x, wk, wq, wv)
    jax.block_until_ready(out)
    assert out.shape == (B, T, H)
    assert jnp.allclose(out, ref, atol=1e-2, rtol=1e-2), "f32 path mismatch vs reference"

    # bf16 MXU operand path (the v6e/v7x-friendly configuration); accumulation stays f32.
    out_bf16 = head_forward(x, wk, wq, wv, compute_dtype=jnp.bfloat16)
    jax.block_until_ready(out_bf16)
    assert out_bf16.shape == (B, T, H)
    assert jnp.allclose(out_bf16, ref, atol=5e-2, rtol=5e-2), "bf16 path mismatch vs reference"

    print("KERNEL_OK")
</pallas_src>

<mosaic_0001>
module attributes {stable_mosaic.version = 11 : i64} {
  func.func @head_kernel(%arg0: i32, %arg1: memref<1x128x384xf32, #tpu.memory_space<vmem>>, %arg2: memref<384x192xf32, #tpu.memory_space<vmem>>, %arg3: memref<1x128x64xf32, #tpu.memory_space<vmem>>) attributes {dimension_semantics = [#tpu.dimension_semantics<parallel>], iteration_bounds = array<i64: 2>, scalar_prefetch = 0 : i64, scratch_operands = 0 : i64, tpu.core_type = #tpu.core_type<tc>, window_params = [{transform_indices = @transform_0, window_bounds = array<i64: 1, 128, 384>}, {pipeline_mode = #tpu.pipeline_mode<synchronous>, transform_indices = @transform_1, window_bounds = array<i64: 384, 192>}, {transform_indices = @transform_2, window_bounds = array<i64: 1, 128, 64>}]} {
    %c0 = arith.constant 0 : index
    %c0_0 = arith.constant 0 : index
    %c0_1 = arith.constant 0 : index
    %0 = vector.load %arg1[%c0, %c0_0, %c0_1] : memref<1x128x384xf32, #tpu.memory_space<vmem>>, vector<1x128x384xf32>
    %1 = vector.shape_cast %0 : vector<1x128x384xf32> to vector<128x384xf32>
    %c0_2 = arith.constant 0 : index
    %c0_3 = arith.constant 0 : index
    %2 = vector.load %arg2[%c0_2, %c0_3] : memref<384x192xf32, #tpu.memory_space<vmem>>, vector<384x192xf32>
    %cst = arith.constant dense<0.000000e+00> : vector<128x192xf32>
    %3 = tpu.matmul %1, %2, %cst {dimension_numbers = #tpu.dot_dimension_numbers<[1], [0], [0], [1], [0, 0, 1, 1], [], []>} : vector<128x384xf32>, vector<384x192xf32>, vector<128x192xf32> -> vector<128x192xf32>
    %4 = vector.extract_strided_slice %3 {offsets = [0, 0], sizes = [128, 64], strides = [1, 1]} : vector<128x192xf32> to vector<128x64xf32>
    %cst_4 = arith.constant 0.0510310382 : f32
    %5 = vector.broadcast %cst_4 : f32 to vector<128x64xf32>
    %6 = arith.mulf %4, %5 : vector<128x64xf32>
    %7 = vector.extract_strided_slice %3 {offsets = [0, 64], sizes = [128, 64], strides = [1, 1]} : vector<128x192xf32> to vector<128x64xf32>
    %8 = vector.extract_strided_slice %3 {offsets = [0, 128], sizes = [128, 64], strides = [1, 1]} : vector<128x192xf32> to vector<128x64xf32>
    %9 = tpu.transpose %7, [1, 0] : vector<128x64xf32> -> vector<64x128xf32>
    %cst_5 = arith.constant dense<0.000000e+00> : vector<128x128xf32>
    %10 = tpu.matmul %6, %9, %cst_5 {dimension_numbers = #tpu.dot_dimension_numbers<[1], [0], [0], [1], [0, 0, 1, 1], [], []>} : vector<128x64xf32>, vector<64x128xf32>, vector<128x128xf32> -> vector<128x128xf32>
    %11 = tpu.iota {dimensions = array<i32: 0>} : vector<128x128xi32>
    %12 = tpu.iota {dimensions = array<i32: 1>} : vector<128x128xi32>
    %13 = arith.cmpi sle, %12, %11 : vector<128x128xi32>
    %cst_6 = arith.constant -1.000000e+30 : f32
    %14 = vector.broadcast %cst_6 : f32 to vector<128x128xf32>
    %15 = arith.select %13, %10, %14 : vector<128x128xi1>, vector<128x128xf32>
    %cst_7 = arith.constant dense<0xFF800000> : vector<128xf32>
    %16 = vector.multi_reduction <maximumf>, %15, %cst_7 [1] : vector<128x128xf32> to vector<128xf32>
    %17 = vector.shape_cast %16 : vector<128xf32> to vector<128x1xf32>
    %18 = vector.broadcast %17 : vector<128x1xf32> to vector<128x128xf32>
    %19 = arith.subf %15, %18 : vector<128x128xf32>
    %20 = math.exp %19 : vector<128x128xf32>
    %cst_8 = arith.constant dense<0.000000e+00> : vector<128xf32>
    %21 = vector.multi_reduction <add>, %20, %cst_8 [1] : vector<128x128xf32> to vector<128xf32>
    %22 = vector.shape_cast %21 : vector<128xf32> to vector<128x1xf32>
    %cst_9 = arith.constant dense<0.000000e+00> : vector<128x64xf32>
    %23 = tpu.matmul %20, %8, %cst_9 {dimension_numbers = #tpu.dot_dimension_numbers<[1], [0], [0], [1], [0, 0, 1, 1], [], []>} : vector<128x128xf32>, vector<128x64xf32>, vector<128x64xf32> -> vector<128x64xf32>
    %24 = tpu.reciprocal %22 {approx = true} : vector<128x1xf32> -> vector<128x1xf32>
    %25 = vector.broadcast %24 : vector<128x1xf32> to vector<128x64xf32>
    %26 = arith.mulf %23, %25 : vector<128x64xf32>
    %c0_10 = arith.constant 0 : index
    %c0_11 = arith.constant 0 : index
    %c0_12 = arith.constant 0 : index
    %27 = vector.load %arg3[%c0_10, %c0_11, %c0_12] : memref<1x128x64xf32, #tpu.memory_space<vmem>>, vector<1x128x64xf32>
    %28 = vector.shape_cast %27 : vector<1x128x64xf32> to vector<128x64xf32>
    %29 = vector.shape_cast %26 : vector<128x64xf32> to vector<1x128x64xf32>
    tpu.vector_store %arg3[%c0_10, %c0_11, %c0_12], %29 {strides = array<i32>} : memref<1x128x64xf32, #tpu.memory_space<vmem>>, vector<1x128x64xf32>,
    return
  }
  func.func @transform_0(%arg0: i32) -> (i32, i32, i32) {
    %c0_i32 = arith.constant 0 : i32
    %c0_i32_0 = arith.constant 0 : i32
    %c0_i32_1 = arith.constant 0 : i32
    return %arg0, %c0_i32, %c0_i32_0 : i32, i32, i32
  }
  func.func @transform_1(%arg0: i32) -> (i32, i32) {
    %c0_i32 = arith.constant 0 : i32
    %c0_i32_0 = arith.constant 0 : i32
    %c0_i32_1 = arith.constant 0 : i32
    return %c0_i32, %c0_i32_0 : i32, i32
  }
  func.func @transform_2(%arg0: i32) -> (i32, i32, i32) {
    %c0_i32 = arith.constant 0 : i32
    %c0_i32_0 = arith.constant 0 : i32
    %c0_i32_1 = arith.constant 0 : i32
    return %arg0, %c0_i32, %c0_i32_0 : i32, i32, i32
  }
}

</mosaic_0001>

<llo_original>
// kernel: tpu_custom_call.1
$region0: #{tpu_custom_call.1}
  #allocation0 [shape = 'u32[]', space=smem, size = 0x4, offset = 0x4, fixed_abs, tag = 'smem constant byte address 0x4 - core index']
  #allocation1 [shape = 'u32[144,128]{1,0:T(1,128)}', space=vmem, size = 0x12000, scoped, tag = 'internal scratch']
  %s0 = inlined_call_operand.vmem [shape: f32[2,128,384], index: 0, kind: input, shape index: {}]
  %s1 = inlined_call_operand.vmem [shape: f32[384,192], index: 1, kind: input, shape index: {}]
  %s2 = inlined_call_operand.vmem [shape: f32[2,128,64], index: 2, kind: output, shape index: {}]
  %s3 = sld [smem:[#allocation0]]
  $region41: #{tpu_custom_call.1} parent=0
    _
  %s5 = ssub.s32 1, %s3
  %s6 = scalar_select 0, %s5, %s3
  loop: start=0, step=1, limit=4
  $region2: #{tpu_custom_call.1} parent=0 // loop_pre_header
    _
  $region3: #{tpu_custom_call.1} parent=0 // loop_header
    %s8 = sphi 0, %s12
    %p9 = scmp.ge.s32.totalorder %s8, 4
    %s18 = sphi 0, %s20
    %s21 = sphi 0, %s18
    %s22 = sphi 0, %s21
    %s38 = sphi 0, %s22
    %s42 = sphi 0, %s42
    %s44 = sphi 0, %s42
    %s45 = sphi 0, %s44
    %s59 = sphi 0, %s45
    %s65 = sphi 0, %s67
    %s68 = sphi 0, %s65
    %s69 = sphi 0, %s68
    %s85 = sphi 0, %s69
  $region4: #{tpu_custom_call.1} parent=0 // loop_header_branch
    %11 = sbr.rel (%p9) target = $region8
  $region5: #{tpu_custom_call.1} parent=0 // loop_body
    %s13 = ssub.s32 %s8, 1
    %s14 = ssub.s32 %s8, 2
    %s15 = sadd.s32 %s8, 1
    %s16 = ssub.s32 %s8, %s15
    %p17 = scmp.eq.s32.totalorder %s16, 0
    %s19 = sadd.s32 %s18, 1
    %s20 = scalar_select %p17, %s18, %s19
    %p23 = pneg %p17
    %p24 = scmp.eq.s32.totalorder %s8, 1
    %p25 = por %p23, %p24
    %p26 = scmp.ne.s32.totalorder %s18, %s21
    %p27 = scmp.eq.s32.totalorder %s8, 0
    %p28 = por %p26, %p27
    %p29 = scmp.ne.s32.totalorder %s18, %s21
    %p30 = scmp.eq.s32.totalorder %s13, 1
    %p31 = por %p29, %p30
    %p32 = scmp.ne.s32.totalorder %s21, %s22
    %p33 = scmp.eq.s32.totalorder %s13, 0
    %p34 = por %p32, %p33
    %p35 = scmp.ne.s32.totalorder %s21, %s22
    %p36 = scmp.eq.s32.totalorder %s14, 1
    %p37 = por %p35, %p36
    %p39 = scmp.ne.s32.totalorder %s22, %s38
    %p40 = scmp.eq.s32.totalorder %s14, 0
    %p41 = por %p39, %p40
    %s43 = sadd.s32 %s42, 1
    %p46 = scmp.eq.s32.totalorder %s8, 1
    %p47 = scmp.ne.s32.totalorder %s42, %s44
    %p48 = scmp.eq.s32.totalorder %s8, 0
    %p49 = por %p47, %p48
    %p50 = scmp.ne.s32.totalorder %s42, %s44
    %p51 = scmp.eq.s32.totalorder %s13, 1
    %p52 = por %p50, %p51
    %p53 = scmp.ne.s32.totalorder %s44, %s45
    %p54 = scmp.eq.s32.totalorder %s13, 0
    %p55 = por %p53, %p54
    %p56 = scmp.ne.s32.totalorder %s44, %s45
    %p57 = scmp.eq.s32.totalorder %s14, 1
    %p58 = por %p56, %p57
    %p60 = scmp.ne.s32.totalorder %s45, %s59
    %p61 = scmp.eq.s32.totalorder %s14, 0
    %p62 = por %p60, %p61
    %s63 = ssub.s32 %s8, %s15
    %p64 = scmp.eq.s32.totalorder %s63, 0
    %s66 = sadd.s32 %s65, 1
    %s67 = scalar_select %p64, %s65, %s66
    %p70 = pneg %p64
    %p71 = scmp.eq.s32.totalorder %s8, 1
    %p72 = por %p70, %p71
    %p73 = scmp.ne.s32.totalorder %s65, %s68
    %p74 = scmp.eq.s32.totalorder %s8, 0
    %p75 = por %p73, %p74
    %p76 = scmp.ne.s32.totalorder %s65, %s68
    %p77 = scmp.eq.s32.totalorder %s13, 1
    %p78 = por %p76, %p77
    %p79 = scmp.ne.s32.totalorder %s68, %s69
    %p80 = scmp.eq.s32.totalorder %s13, 0
    %p81 = por %p79, %p80
    %p82 = scmp.ne.s32.totalorder %s68, %s69
    %p83 = scmp.eq.s32.totalorder %s14, 1
    %p84 = por %p82, %p83
    %p86 = scmp.ne.s32.totalorder %s69, %s85
    %p87 = scmp.eq.s32.totalorder %s14, 0
    %p88 = por %p86, %p87
    %p89 = scmp.le.s32.totalorder 1, %s8
    %p90 = scmp.lt.s32.totalorder %s8, 3
    %p91 = pnand %p89, %p90
    %p92 = pneg %p91
    // Predicated region
    $region9: #{tpu_custom_call.1} parent=5 // pred_check
      _
    $region10: #{tpu_custom_call.1} parent=5 // pred_check_branch
      %94 = sbr.rel (%p91) target = $region12
    $region11: #{tpu_custom_call.1} parent=5 // pred_region
      %s95 = ssub.s32 %s8, 1
      // Predicated region
      $region13: #{tpu_custom_call.1} parent=11 // pred_check
        %p96 = pneg %p55
      $region14: #{tpu_custom_call.1} parent=11 // pred_check_branch
        %98 = sbr.rel (%p96) target = $region16
      $region15: #{tpu_custom_call.1} parent=11 // pred_region
        _
      $region16: #{tpu_custom_call.1} parent=11 // pred_fallthru
        _
    $region12: #{tpu_custom_call.1} parent=5 // pred_fallthru
      _
    %p99 = scmp.lt.s32.totalorder %s8, 2
    // Predicated region
    $region17: #{tpu_custom_call.1} parent=5 // pred_check
      %p100 = pneg %p99
    $region18: #{tpu_custom_call.1} parent=5 // pred_check_branch
      %102 = sbr.rel (%p100) target = $region20
    $region19: #{tpu_custom_call.1} parent=5 // pred_region
      // Predicated region
      $region21: #{tpu_custom_call.1} parent=19 // pred_check
        %p103 = pneg %p28
      $region22: #{tpu_custom_call.1} parent=19 // pred_check_branch
        %105 = sbr.rel (%p103) target = $region24
      $region23: #{tpu_custom_call.1} parent=19 // pred_region
        %p106 = scmp.lt.s32.totalorder %s8, 1
        %s107 = scalar_select %p106, %s8, 1
        %s108 = smul.addr %s107, 48
        %s109 = smul.addr %s108, 8
        %s110 = scalar_lea.vmem %s0, %s109
      $region24: #{tpu_custom_call.1} parent=19 // pred_fallthru
        _
    $region20: #{tpu_custom_call.1} parent=5 // pred_fallthru
      _
    %p111 = scmp.le.s32.totalorder 1, %s8
    %p112 = scmp.lt.s32.totalorder %s8, 3
    %p113 = pnand %p111, %p112
    %p114 = pneg %p113
    // Predicated region
    $region25: #{tpu_custom_call.1} parent=5 // pred_check
      _
    $region26: #{tpu_custom_call.1} parent=5 // pred_check_branch
      %116 = sbr.rel (%p113) target = $region28
    $region27: #{tpu_custom_call.1} parent=5 // pred_region
      %s117 = ssub.s32 %s8, 1
      %p118 = scmp.lt.s32.totalorder %s13, 1
      %s119 = scalar_select %p118, %s13, 1
      %s120 = smul.addr %s119, 48
      %s121 = smul.addr %s120, 8
      %s122 = scalar_lea.vmem %s0, %s121
      %p123 = pneg %p34
      %p124 = pneg %p31
      %p125 = pneg %p55
      %p126 = pneg %p52
      %p127 = pneg %p81
      %p128 = pneg %p78
      %p129 = scmp.lt.s32.totalorder %s13, 1
      %s130 = scalar_select %p129, %s13, 1
      %s131 = smul.addr %s130, 16
      %s132 = smul.addr %s131, 8
      %s133 = scalar_lea.vmem %s2, %s132
      %p134 = scmp.lt.s32.totalorder %s13, 1
      %s135 = scalar_select %p134, %s13, 1
      %s136 = smul.addr %s135, 48
      %s137 = smul.addr %s136, 8
      %s138 = scalar_lea.vmem %s0, %s137
      %p139 = scmp.lt.s32.totalorder %s13, 1
      %s140 = scalar_select %p139, %s13, 1
      %s141 = smul.addr %s140, 16
      %s142 = smul.addr %s141, 8
      %s143 = scalar_lea.vmem %s2, %s142
      %v144 = vld [vmem:[%s138] sm:$0xff]
      %v145 = vld [vmem:[%s138 + $0x8] sm:$0xff]
      %v146 = vld [vmem:[%s138 + $0x10] sm:$0xff]
      %v147 = vld [vmem:[%s138 + $0x18] sm:$0xff]
      %v148 = vld [vmem:[%s138 + $0x20] sm:$0xff]
      %v149 = vld [vmem:[%s138 + $0x28] sm:$0xff]
      %v150 = vld [vmem:[%s138 + $0x30] sm:$0xff]
      %v151 = vld [vmem:[%s138 + $0x38] sm:$0xff]
      %v152 = vld [vmem:[%s138 + $0x40] sm:$0xff]
      %v153 = vld [vmem:[%s138 + $0x48] sm:$0xff]
      %v154 = vld [vmem:[%s138 + $0x50] sm:$0xff]
      %v155 = vld [vmem:[%s138 + $0x58] sm:$0xff]
      %v156 = vld [vmem:[%s138 + $0x60] sm:$0xff]
      %v157 = vld [vmem:[%s138 + $0x68] sm:$0xff]
      %v158 = vld [vmem:[%s138 + $0x70] sm:$0xff]
      %v159 = vld [vmem:[%s138 + $0x78] sm:$0xff]
      %v160 = vld [vmem:[%s138 + $0x80] sm:$0xff]
      %v161 = vld [vmem:[%s138 + $0x88] sm:$0xff]
      %v162 = vld [vmem:[%s138 + $0x90] sm:$0xff]
      %v163 = vld [vmem:[%s138 + $0x98] sm:$0xff]
      %v164 = vld [vmem:[%s138 + $0xa0] sm:$0xff]
      %v165 = vld [vmem:[%s138 + $0xa8] sm:$0xff]
      %v166 = vld [vmem:[%s138 + $0xb0] sm:$0xff]
      %v167 = vld [vmem:[%s138 + $0xb8] sm:$0xff]
      %v168 = vld [vmem:[%s138 + $0xc0] sm:$0xff]
      %v169 = vld [vmem:[%s138 + $0xc8] sm:$0xff]
      %v170 = vld [vmem:[%s138 + $0xd0] sm:$0xff]
      %v171 = vld [vmem:[%s138 + $0xd8] sm:$0xff]
      %v172 = vld [vmem:[%s138 + $0xe0] sm:$0xff]
      %v173 = vld [vmem:[%s138 + $0xe8] sm:$0xff]
      %v174 = vld [vmem:[%s138 + $0xf0] sm:$0xff]
      %v175 = vld [vmem:[%s138 + $0xf8] sm:$0xff]
      %v176 = vld [vmem:[%s138 + $0x100] sm:$0xff]
      %v177 = vld [vmem:[%s138 + $0x108] sm:$0xff]
      %v178 = vld [vmem:[%s138 + $0x110] sm:$0xff]
      %v179 = vld [vmem:[%s138 + $0x118] sm:$0xff]
      %v180 = vld [vmem:[%s138 + $0x120] sm:$0xff]
      %v181 = vld [vmem:[%s138 + $0x128] sm:$0xff]
      %v182 = vld [vmem:[%s138 + $0x130] sm:$0xff]
      %v183 = vld [vmem:[%s138 + $0x138] sm:$0xff]
      %v184 = vld [vmem:[%s138 + $0x140] sm:$0xff]
      %v185 = vld [vmem:[%s138 + $0x148] sm:$0xff]
      %v186 = vld [vmem:[%s138 + $0x150] sm:$0xff]
      %v187 = vld [vmem:[%s138 + $0x158] sm:$0xff]
      %v188 = vld [vmem:[%s138 + $0x160] sm:$0xff]
      %v189 = vld [vmem:[%s138 + $0x168] sm:$0xff]
      %v190 = vld [vmem:[%s138 + $0x170] sm:$0xff]
      %v191 = vld [vmem:[%s138 + $0x178] sm:$0xff]
      %v192 = vld [vmem:[%s1] sm:$0xff]
      %v193 = vld [vmem:[%s1 + $0x8] sm:$0xff]
      %v194 = vld [vmem:[%s1 + $0x10] sm:$0xff]
      %v195 = vld [vmem:[%s1 + $0x18] sm:$0xff]
      %v196 = vld [vmem:[%s1 + $0x20] sm:$0xff]
      %v197 = vld [vmem:[%s1 + $0x28] sm:$0xff]
      %v198 = vld [vmem:[%s1 + $0x30] sm:$0xff]
      %v199 = vld [vmem:[%s1 + $0x38] sm:$0xff]
      %v200 = vld [vmem:[%s1 + $0x40] sm:$0xff]
      %v201 = vld [vmem:[%s1 + $0x48] sm:$0xff]
      %v202 = vld [vmem:[%s1 + $0x50] sm:$0xff]
      %v203 = vld [vmem:[%s1 + $0x58] sm:$0xff]
      %v204 = vld [vmem:[%s1 + $0x60] sm:$0xff]
      %v205 = vld [vmem:[%s1 + $0x68] sm:$0xff]
      %v206 = vld [vmem:[%s1 + $0x70] sm:$0xff]
      %v207 = vld [vmem:[%s1 + $0x78] sm:$0xff]
      %v208 = vld [vmem:[%s1 + $0x80] sm:$0xff]
      %v209 = vld [vmem:[%s1 + $0x88] sm:$0xff]
      %v210 = vld [vmem:[%s1 + $0x90] sm:$0xff]
      %v211 = vld [vmem:[%s1 + $0x98] sm:$0xff]
      %v212 = vld [vmem:[%s1 + $0xa0] sm:$0xff]
      %v213 = vld [vmem:[%s1 + $0xa8] sm:$0xff]
      %v214 = vld [vmem:[%s1 + $0xb0] sm:$0xff]
      %v215 = vld [vmem:[%s1 + $0xb8] sm:$0xff]
      %v216 = vld [vmem:[%s1 + $0xc0] sm:$0xff]
      %v217 = vld [vmem:[%s1 + $0xc8] sm:$0xff]
      %v218 = vld [vmem:[%s1 + $0xd0] sm:$0xff]
      %v219 = vld [vmem:[%s1 + $0xd8] sm:$0xff]
      %v220 = vld [vmem:[%s1 + $0xe0] sm:$0xff]
      %v221 = vld [vmem:[%s1 + $0xe8] sm:$0xff]
      %v222 = vld [vmem:[%s1 + $0xf0] sm:$0xff]
      %v223 = vld [vmem:[%s1 + $0xf8] sm:$0xff]
      %v224 = vld [vmem:[%s1 + $0x100] sm:$0xff]
      %v225 = vld [vmem:[%s1 + $0x108] sm:$0xff]
      %v226 = vld [vmem:[%s1 + $0x110] sm:$0xff]
      %v227 = vld [vmem:[%s1 + $0x118] sm:$0xff]
      %v228 = vld [vmem:[%s1 + $0x120] sm:$0xff]
      %v229 = vld [vmem:[%s1 + $0x128] sm:$0xff]
      %v230 = vld [vmem:[%s1 + $0x130] sm:$0xff]
      %v231 = vld [vmem:[%s1 + $0x138] sm:$0xff]
      %v232 = vld [vmem:[%s1 + $0x140] sm:$0xff]
      %v233 = vld [vmem:[%s1 + $0x148] sm:$0xff]
      %v234 = vld [vmem:[%s1 + $0x150] sm:$0xff]
      %v235 = vld [vmem:[%s1 + $0x158] sm:$0xff]
      %v236 = vld [vmem:[%s1 + $0x160] sm:$0xff]
      %v237 = vld [vmem:[%s1 + $0x168] sm:$0xff]
      %v238 = vld [vmem:[%s1 + $0x170] sm:$0xff]
      %v239 = vld [vmem:[%s1 + $0x178] sm:$0xff]
      %v240 = vld [vmem:[%s1 + $0x180] sm:$0xff]
      %v241 = vld [vmem:[%s1 + $0x188] sm:$0xff]
      %v242 = vld [vmem:[%s1 + $0x190] sm:$0xff]
      %v243 = vld [vmem:[%s1 + $0x198] sm:$0xff]
      %v244 = vld [vmem:[%s1 + $0x1a0] sm:$0xff]
      %v245 = vld [vmem:[%s1 + $0x1a8] sm:$0xff]
      %v246 = vld [vmem:[%s1 + $0x1b0] sm:$0xff]
      %v247 = vld [vmem:[%s1 + $0x1b8] sm:$0xff]
      %v248 = vld [vmem:[%s1 + $0x1c0] sm:$0xff]
      %v249 = vld [vmem:[%s1 + $0x1c8] sm:$0xff]
      %v250 = vld [vmem:[%s1 + $0x1d0] sm:$0xff]
      %v251 = vld [vmem:[%s1 + $0x1d8] sm:$0xff]
      %v252 = vld [vmem:[%s1 + $0x1e0] sm:$0xff]
      %v253 = vld [vmem:[%s1 + $0x1e8] sm:$0xff]
      %v254 = vld [vmem:[%s1 + $0x1f0] sm:$0xff]
      %v255 = vld [vmem:[%s1 + $0x1f8] sm:$0xff]
      %v256 = vld [vmem:[%s1 + $0x200] sm:$0xff]
      %v257 = vld [vmem:[%s1 + $0x208] sm:$0xff]
      %v258 = vld [vmem:[%s1 + $0x210] sm:$0xff]
      %v259 = vld [vmem:[%s1 + $0x218] sm:$0xff]
      %v260 = vld [vmem:[%s1 + $0x220] sm:$0xff]
      %v261 = vld [vmem:[%s1 + $0x228] sm:$0xff]
      %v262 = vld [vmem:[%s1 + $0x230] sm:$0xff]
      %v263 = vld [vmem:[%s1 + $0x238] sm:$0xff]
      %v264 = vld [vmem:[%s1 + $0x240] sm:$0xff]
      %v265 = vld [vmem:[%s1 + $0x248] sm:$0xff]
      %v266 = vld [vmem:[%s1 + $0x250] sm:$0xff]
      %v267 = vld [vmem:[%s1 + $0x258] sm:$0xff]
      %v268 = vld [vmem:[%s1 + $0x260] sm:$0xff]
      %v269 = vld [vmem:[%s1 + $0x268] sm:$0xff]
      %v270 = vld [vmem:[%s1 + $0x270] sm:$0xff]
      %v271 = vld [vmem:[%s1 + $0x278] sm:$0xff]
      %v272 = vld [vmem:[%s1 + $0x280] sm:$0xff]
      %v273 = vld [vmem:[%s1 + $0x288] sm:$0xff]
      %v274 = vld [vmem:[%s1 + $0x290] sm:$0xff]
      %v275 = vld [vmem:[%s1 + $0x298] sm:$0xff]
      %v276 = vld [vmem:[%s1 + $0x2a0] sm:$0xff]
      %v277 = vld [vmem:[%s1 + $0x2a8] sm:$0xff]
      %v278 = vld [vmem:[%s1 + $0x2b0] sm:$0xff]
      %v279 = vld [vmem:[%s1 + $0x2b8] sm:$0xff]
      %v280 = vld [vmem:[%s1 + $0x2c0] sm:$0xff]
      %v281 = vld [vmem:[%s1 + $0x2c8] sm:$0xff]
      %v282 = vld [vmem:[%s1 + $0x2d0] sm:$0xff]
      %v283 = vld [vmem:[%s1 + $0x2d8] sm:$0xff]
      %v284 = vld [vmem:[%s1 + $0x2e0] sm:$0xff]
      %v285 = vld [vmem:[%s1 + $0x2e8] sm:$0xff]
      %v286 = vld [vmem:[%s1 + $0x2f0] sm:$0xff]
      %v287 = vld [vmem:[%s1 + $0x2f8] sm:$0xff]
      %288 = vmatprep.subr.mxu0 %v193
      %289 = vmatpush1.msra.mxu0 %v192
      %290 = vmatprep.subr.mxu0 %v195
      %291 = vmatpush1.msra.mxu0 %v194
      %292 = vmatprep.subr.mxu0 %v197
      %293 = vmatpush1.msra.mxu0 %v196
      %294 = vmatprep.subr.mxu0 %v199
      %295 = vmatpush1.msra.mxu0 %v198
      %296 = vmatprep.subr.mxu0 %v201
      %297 = vmatpush1.msra.mxu0 %v200
      %298 = vmatprep.subr.mxu0 %v203
      %299 = vmatpush1.msra.mxu0 %v202
      %300 = vmatprep.subr.mxu0 %v205
      %301 = vmatpush1.msra.mxu0 %v204
      %302 = vmatprep.subr.mxu0 %v207
      %303 = vmatpush1.msra.mxu0 %v206
      %304 = vmatprep.subr.mxu0 %v209
      %305 = vmatpush1.msra.mxu0 %v208
      %306 = vmatprep.subr.mxu0 %v211
      %307 = vmatpush1.msra.mxu0 %v210
      %308 = vmatprep.subr.mxu0 %v213
      %309 = vmatpush1.msra.mxu0 %v212
      %310 = vmatprep.subr.mxu0 %v215
      %311 = vmatpush1.msra.mxu0 %v214
      %312 = vmatprep.subr.mxu0 %v217
      %313 = vmatpush1.msra.mxu0 %v216
      %314 = vmatprep.subr.mxu0 %v219
      %315 = vmatpush1.msra.mxu0 %v218
      %316 = vmatprep.subr.mxu0 %v221
      %317 = vmatpush1.msra.mxu0 %v220
      %318 = vmatprep.subr.mxu0 %v223
      %319 = vmatpush1.msra.mxu0 %v222
      %320 = vmatprep.subr.mxu0 %v225
      %321 = vmatpush1.msra.mxu0 %v224
      %322 = vmatprep.subr.mxu0 %v227
      %323 = vmatpush1.msra.mxu0 %v226
      %324 = vmatprep.subr.mxu0 %v229
      %325 = vmatpush1.msra.mxu0 %v228
      %326 = vmatprep.subr.mxu0 %v231
      %327 = vmatpush1.msra.mxu0 %v230
      %328 = vmatprep.subr.mxu0 %v233
      %329 = vmatpush1.msra.mxu0 %v232
      %330 = vmatprep.subr.mxu0 %v235
      %331 = vmatpush1.msra.mxu0 %v234
      %332 = vmatprep.subr.mxu0 %v237
      %333 = vmatpush1.msra.mxu0 %v236
      %334 = vmatprep.subr.mxu0 %v239
      %335 = vmatpush1.msra.mxu0 %v238
      %336 = vmatprep.subr.mxu0 %v241
      %337 = vmatpush1.msra.mxu0 %v240
      %338 = vmatprep.subr.mxu0 %v243
      %339 = vmatpush1.msra.mxu0 %v242
      %340 = vmatprep.subr.mxu0 %v245
      %341 = vmatpush1.msra.mxu0 %v244
      %342 = vmatprep.subr.mxu0 %v247
      %343 = vmatpush1.msra.mxu0 %v246
      %344 = vmatprep.subr.mxu0 %v249
      %345 = vmatpush1.msra.mxu0 %v248
      %346 = vmatprep.subr.mxu0 %v251
      %347 = vmatpush1.msra.mxu0 %v250
      %348 = vmatprep.subr.mxu0 %v253
      %349 = vmatpush1.msra.mxu0 %v252
      %350 = vmatprep.subr.mxu0 %v255
      %351 = vmatpush1.msra.mxu0 %v254
      %352 = vmatprep.mubr.f32.mxu0 %v145
      %353 = vmatmul.mubr.f32.gmra.mrb[0].mxu0 %v144
      %v354 = vpop.f32.mrb[0].mxu0
      %v355 = vadd.f32 0.0, %v354
      %v356 = vpop.f32.mrb[0].mxu0
      %v357 = vadd.f32 0.0, %v356
      %358 = vmatprep.mubr.f32.mxu0 %v148
      %359 = vmatmul.mubr.f32.gmra.mrb[0].mxu0 %v147
      %v360 = vpop.f32.mrb[0].mxu0
      %v361 = vadd.f32 0.0, %v360
      %v362 = vpop.f32.mrb[0].mxu0
      %v363 = vadd.f32 0.0, %v362
      %364 = vmatprep.mubr.f32.mxu0 %v151
      %365 = vmatmul.mubr.f32.gmra.mrb[0].mxu0 %v150
      %v366 = vpop.f32.mrb[0].mxu0
      %v367 = vadd.f32 0.0, %v366
      %v368 = vpop.f32.mrb[0].mxu0
      %v369 = vadd.f32 0.0, %v368
      %370 = vmatprep.mubr.f32.mxu0 %v154
      %371 = vmatmul.mubr.f32.gmra.mrb[0].mxu0 %v153
      %v372 = vpop.f32.mrb[0].mxu0
      %v373 = vadd.f32 0.0, %v372
      %v374 = vpop.f32.mrb[0].mxu0
      %v375 = vadd.f32 0.0, %v374
      %376 = vmatprep.mubr.f32.mxu0 %v157
      %377 = vmatmul.mubr.f32.gmra.mrb[0].mxu0 %v156
      %v378 = vpop.f32.mrb[0].mxu0
      %v379 = vadd.f32 0.0, %v378
      %v380 = vpop.f32.mrb[0].mxu0
      %v381 = vadd.f32 0.0, %v380
      %382 = vmatprep.mubr.f32.mxu0 %v160
      %383 = vmatmul.mubr.f32.gmra.mrb[0].mxu0 %v159
      %v384 = vpop.f32.mrb[0].mxu0
      %v385 = vadd.f32 0.0, %v384
      %v386 = vpop.f32.mrb[0].mxu0
      %v387 = vadd.f32 0.0, %v386
      %388 = vmatprep.mubr.f32.mxu0 %v163
      %389 = vmatmul.mubr.f32.gmra.mrb[0].mxu0 %v162
      %v390 = vpop.f32.mrb[0].mxu0
      %v391 = vadd.f32 0.0, %v390
      %v392 = vpop.f32.mrb[0].mxu0
      %v393 = vadd.f32 0.0, %v392
      %394 = vmatprep.mubr.f32.mxu0 %v166
      %395 = vmatmul.mubr.f32.gmra.mrb[0].mxu0 %v165
      %v396 = vpop.f32.mrb[0].mxu0
      %v397 = vadd.f32 0.0, %v396
      %v398 = vpop.f32.mrb[0].mxu0
      %v399 = vadd.f32 0.0, %v398
      %400 = vmatprep.mubr.f32.mxu0 %v169
      %401 = vmatmul.mubr.f32.gmra.mrb[0].mxu0 %v168
      %v402 = vpop.f32.mrb[0].mxu0
      %v403 = vadd.f32 0.0, %v402
      %v404 = vpop.f32.mrb[0].mxu0
      %v405 = vadd.f32 0.0, %v404
      %406 = vmatprep.mubr.f32.mxu0 %v172
      %407 = vmatmul.mubr.f32.gmra.mrb[0].mxu0 %v171
      %v408 = vpop.f32.mrb[0].mxu0
      %v409 = vadd.f32 0.0, %v408
      %v410 = vpop.f32.mrb[0].mxu0
      %v411 = vadd.f32 0.0, %v410
      %412 = vmatprep.mubr.f32.mxu0 %v175
      %413 = vmatmul.mubr.f32.gmra.mrb[0].mxu0 %v174
      %v414 = vpop.f32.mrb[0].mxu0
      %v415 = vadd.f32 0.0, %v414
      %v416 = vpop.f32.mrb[0].mxu0
      %v417 = vadd.f32 0.0, %v416
      %418 = vmatprep.mubr.f32.mxu0 %v178
      %419 = vmatmul.mubr.f32.gmra.mrb[0].mxu0 %v177
      %v420 = vpop.f32.mrb[0].mxu0
      %v421 = vadd.f32 0.0, %v420
      %v422 = vpop.f32.mrb[0].mxu0
      %v423 = vadd.f32 0.0, %v422
      %424 = vmatprep.mubr.f32.mxu0 %v181
      %425 = vmatmul.mubr.f32.gmra.mrb[0].mxu0 %v180
      %v426 = vpop.f32.mrb[0].mxu0
      %v427 = vadd.f32 0.0, %v426
      %v428 = vpop.f32.mrb[0].mxu0
      %v429 = vadd.f32 0.0, %v428
      %430 = vmatprep.mubr.f32.mxu0 %v184
      %431 = vmatmul.mubr.f32.gmra.mrb[0].mxu0 %v183
      %v432 = vpop.f32.mrb[0].mxu0
      %v433 = vadd.f32 0.0, %v432
      %v434 = vpop.f32.mrb[0].mxu0
      %v435 = vadd.f32 0.0, %v434
      %436 = vmatprep.mubr.f32.mxu0 %v187
      %437 = vmatmul.mubr.f32.gmra.mrb[0].mxu0 %v186
      %v438 = vpop.f32.mrb[0].mxu0
      %v439 = vadd.f32 0.0, %v438
      %v440 = vpop.f32.mrb[0].mxu0
      %v441 = vadd.f32 0.0, %v440
      %442 = vmatprep.mubr.f32.mxu0 %v190
      %443 = vmatmul.mubr.f32.gmra.mrb[0].mxu0 %v189
      %v444 = vpop.f32.mrb[0].mxu0
      %v445 = vadd.f32 0.0, %v444
      %v446 = vpop.f32.mrb[0].mxu0
      %v447 = vadd.f32 0.0, %v446
      %448 = vdwg.mxu0
      %449 = vmatprep.subr.mxu0 %v257
      %450 = vmatpush1.msra.mxu0 %v256
      %451 = vmatprep.subr.mxu0 %v259
      %452 = vmatpush1.msra.mxu0 %v258
      %453 = vmatprep.subr.mxu0 %v261
      %454 = vmatpush1.msra.mxu0 %v260
      %455 = vmatprep.subr.mxu0 %v263
      %456 = vmatpush1.msra.mxu0 %v262
      %457 = vmatprep.subr.mxu0 %v265
      %458 = vmatpush1.msra.mxu0 %v264
      %459 = vmatprep.subr.mxu0 %v267
      %460 = vmatpush1.msra.mxu0 %v266
      %461 = vmatprep.subr.mxu0 %v269
      %462 = vmatpush1.msra.mxu0 %v268
      %463 = vmatprep.subr.mxu0 %v271
      %464 = vmatpush1.msra.mxu0 %v270
      %465 = vmatprep.subr.mxu0 %v273
      %466 = vmatpush1.msra.mxu0 %v272
      %467 = vmatprep.subr.mxu0 %v275
      %468 = vmatpush1.msra.mxu0 %v274
      %469 = vmatprep.subr.mxu0 %v277
      %470 = vmatpush1.msra.mxu0 %v276
      %471 = vmatprep.subr.mxu0 %v279
      %472 = vmatpush1.msra.mxu0 %v278
      %473 = vmatprep.subr.mxu0 %v281
      %474 = vmatpush1.msra.mxu0 %v280
      %475 = vmatprep.subr.mxu0 %v283
      %476 = vmatpush1.msra.mxu0 %v282
      %477 = vmatprep.subr.mxu0 %v285
      %478 = vmatpush1.msra.mxu0 %v284
      %479 = vmatprep.subr.mxu0 %v287
      %480 = vmatpush1.msra.mxu0 %v286
      %481 = vmatprep.subr.mxu0 0.0
      %482 = vmatpush1.msra.mxu0 0.0
      %483 = vmatprep.subr.mxu0 0.0
      %484 = vmatpush1.msra.mxu0 0.0
      %485 = vmatprep.subr.mxu0 0.0
      %486 = vmatpush1.msra.mxu0 0.0
      %487 = vmatprep.subr.mxu0 0.0
      %488 = vmatpush1.msra.mxu0 0.0
      %489 = vmatprep.subr.mxu0 0.0
      %490 = vmatpush1.msra.mxu0 0.0
      %491 = vmatprep.subr.mxu0 0.0
      %492 = vmatpush1.msra.mxu0 0.0
      %493 = vmatprep.subr.mxu0 0.0
      %494 = vmatpush1.msra.mxu0 0.0
      %495 = vmatprep.subr.mxu0 0.0
      %496 = vmatpush1.msra.mxu0 0.0
      %497 = vmatprep.subr.mxu0 0.0
      %498 = vmatpush1.msra.mxu0 0.0
      %499 = vmatprep.subr.mxu0 0.0
      %500 = vmatpush1.msra.mxu0 0.0
      %501 = vmatprep.subr.mxu0 0.0
      %502 = vmatpush1.msra.mxu0 0.0
      %503 = vmatprep.subr.mxu0 0.0
      %504 = vmatpush1.msra.mxu0 0.0
      %505 = vmatprep.subr.mxu0 0.0
      %506 = vmatpush1.msra.mxu0 0.0
      %507 = vmatprep.subr.mxu0 0.0
      %508 = vmatpush1.msra.mxu0 0.0
      %509 = vmatprep.subr.mxu0 0.0
      %510 = vmatpush1.msra.mxu0 0.0
      %511 = vmatprep.subr.mxu0 0.0
      %512 = vmatpush1.msra.mxu0 0.0
      %513 = vmatprep.mubr.f32.mxu0 0.0
      %514 = vmatmul.mubr.f32.gmra.mrb[0].mxu0 %v146
      %v515 = vpop.f32.mrb[0].mxu0
      %v516 = vadd.f32 %v355, %v515
      %v517 = vpop.f32.mrb[0].mxu0
      %v518 = vadd.f32 %v357, %v517
      %519 = vmatprep.mubr.f32.mxu0 0.0
      %520 = vmatmul.mubr.f32.gmra.mrb[0].mxu0 %v149
      %v521 = vpop.f32.mrb[0].mxu0
      %v522 = vadd.f32 %v361, %v521
      %v523 = vpop.f32.mrb[0].mxu0
      %v524 = vadd.f32 %v363, %v523
      %525 = vmatprep.mubr.f32.mxu0 0.0
      %526 = vmatmul.mubr.f32.gmra.mrb[0].mxu0 %v152
      %v527 = vpop.f32.mrb[0].mxu0
      %v528 = vadd.f32 %v367, %v527
      %v529 = vpop.f32.mrb[0].mxu0
      %v530 = vadd.f32 %v369, %v529
      %531 = vmatprep.mubr.f32.mxu0 0.0
      %532 = vmatmul.mubr.f32.gmra.mrb[0].mxu0 %v155
      %v533 = vpop.f32.mrb[0].mxu0
      %v534 = vadd.f32 %v373, %v533
      %v535 = vpop.f32.mrb[0].mxu0
      %v536 = vadd.f32 %v375, %v535
      %537 = vmatprep.mubr.f32.mxu0 0.0
      %538 = vmatmul.mubr.f32.gmra.mrb[0].mxu0 %v158
      %v539 = vpop.f32.mrb[0].mxu0
      %v540 = vadd.f32 %v379, %v539
      %v541 = vpop.f32.mrb[0].mxu0
      %v542 = vadd.f32 %v381, %v541
      %543 = vmatprep.mubr.f32.mxu0 0.0
      %544 = vmatmul.mubr.f32.gmra.mrb[0].mxu0 %v161
      %v545 = vpop.f32.mrb[0].mxu0
      %v546 = vadd.f32 %v385, %v545
      %v547 = vpop.f32.mrb[0].mxu0
      %v548 = vadd.f32 %v387, %v547
      %549 = vmatprep.mubr.f32.mxu0 0.0
      %550 = vmatmul.mubr.f32.gmra.mrb[0].mxu0 %v164
      %v551 = vpop.f32.mrb[0].mxu0
      %v552 = vadd.f32 %v391, %v551
      %v553 = vpop.f32.mrb[0].mxu0
      %v554 = vadd.f32 %v393, %v553
      %555 = vmatprep.mubr.f32.mxu0 0.0
      %556 = vmatmul.mubr.f32.gmra.mrb[0].mxu0 %v167
      %v557 = vpop.f32.mrb[0].mxu0
      %v558 = vadd.f32 %v397, %v557
      %v559 = vpop.f32.mrb[0].mxu0
      %v560 = vadd.f32 %v399, %v559
      %561 = vmatprep.mubr.f32.mxu0 0.0
      %562 = vmatmul.mubr.f32.gmra.mrb[0].mxu0 %v170
      %v563 = vpop.f32.mrb[0].mxu0
      %v564 = vadd.f32 %v403, %v563
      %v565 = vpop.f32.mrb[0].mxu0
      %v566 = vadd.f32 %v405, %v565
      %567 = vmatprep.mubr.f32.mxu0 0.0
      %568 = vmatmul.mubr.f32.gmra.mrb[0].mxu0 %v173
      %v569 = vpop.f32.mrb[0].mxu0
      %v570 = vadd.f32 %v409, %v569
      %v571 = vpop.f32.mrb[0].mxu0
      %v572 = vadd.f32 %v411, %v571
      %573 = vmatprep.mubr.f32.mxu0 0.0
      %574 = vmatmul.mubr.f32.gmra.mrb[0].mxu0 %v176
      %v575 = vpop.f32.mrb[0].mxu0
      %v576 = vadd.f32 %v415, %v575
      %v577 = vpop.f32.mrb[0].mxu0
      %v578 = vadd.f32 %v417, %v577
      %579 = vmatprep.mubr.f32.mxu0 0.0
      %580 = vmatmul.mubr.f32.gmra.mrb[0].mxu0 %v179
      %v581 = vpop.f32.mrb[0].mxu0
      %v582 = vadd.f32 %v421, %v581
      %v583 = vpop.f32.mrb[0].mxu0
      %v584 = vadd.f32 %v423, %v583
      %585 = vmatprep.mubr.f32.mxu0 0.0
      %586 = vmatmul.mubr.f32.gmra.mrb[0].mxu0 %v182
      %v587 = vpop.f32.mrb[0].mxu0
      %v588 = vadd.f32 %v427, %v587
      %v589 = vpop.f32.mrb[0].mxu0
      %v590 = vadd.f32 %v429, %v589
      %591 = vmatprep.mubr.f32.mxu0 0.0
      %592 = vmatmul.mubr.f32.gmra.mrb[0].mxu0 %v185
      %v593 = vpop.f32.mrb[0].mxu0
      %v594 = vadd.f32 %v433, %v593
      %v595 = vpop.f32.mrb[0].mxu0
      %v596 = vadd.f32 %v435, %v595
      %597 = vmatprep.mubr.f32.mxu0 0.0
      %598 = vmatmul.mubr.f32.gmra.mrb[0].mxu0 %v188
      %v599 = vpop.f32.mrb[0].mxu0
      %v600 = vadd.f32 %v439, %v599
      %v601 = vpop.f32.mrb[0].mxu0
      %v602 = vadd.f32 %v441, %v601
      %603 = vmatprep.mubr.f32.mxu0 0.0
      %604 = vmatmul.mubr.f32.gmra.mrb[0].mxu0 %v191
      %v605 = vpop.f32.mrb[0].mxu0
      %v606 = vadd.f32 %v445, %v605
      %v607 = vpop.f32.mrb[0].mxu0
      %v608 = vadd.f32 %v447, %v607
      %609 = vdwg.mxu0
      %v610 = vmul.f32 %v516, 0.05103104
      %v611 = vmul.f32 %v522, 0.05103104
      %v612 = vmul.f32 %v528, 0.05103104
      %v613 = vmul.f32 %v534, 0.05103104
      %v614 = vmul.f32 %v540, 0.05103104
      %v615 = vmul.f32 %v546, 0.05103104
      %v616 = vmul.f32 %v552, 0.05103104
      %v617 = vmul.f32 %v558, 0.05103104
      %v618 = vmul.f32 %v564, 0.05103104
      %v619 = vmul.f32 %v570, 0.05103104
      %v620 = vmul.f32 %v576, 0.05103104
      %v621 = vmul.f32 %v582, 0.05103104
      %v622 = vmul.f32 %v588, 0.05103104
      %v623 = vmul.f32 %v594, 0.05103104
      %v624 = vmul.f32 %v600, 0.05103104
      %v625 = vmul.f32 %v606, 0.05103104
      %642 = vrot.lane.b32.xlu0 %v516, 64
      %v643 = vpop.permute.xlu0 %642
      %644 = vrot.lane.b32.xlu0 %v522, 64
      %v645 = vpop.permute.xlu0 %644
      %646 = vrot.lane.b32.xlu0 %v528, 64
      %v647 = vpop.permute.xlu0 %646
      %648 = vrot.lane.b32.xlu0 %v534, 64
      %v649 = vpop.permute.xlu0 %648
      %650 = vrot.lane.b32.xlu0 %v540, 64
      %v651 = vpop.permute.xlu0 %650
      %652 = vrot.lane.b32.xlu0 %v546, 64
      %v653 = vpop.permute.xlu0 %652
      %654 = vrot.lane.b32.xlu0 %v552, 64
      %v655 = vpop.permute.xlu0 %654
      %656 = vrot.lane.b32.xlu0 %v558, 64
      %v657 = vpop.permute.xlu0 %656
      %658 = vrot.lane.b32.xlu0 %v564, 64
      %v659 = vpop.permute.xlu0 %658
      %660 = vrot.lane.b32.xlu0 %v570, 64
      %v661 = vpop.permute.xlu0 %660
      %662 = vrot.lane.b32.xlu0 %v576, 64
      %v663 = vpop.permute.xlu0 %662
      %664 = vrot.lane.b32.xlu0 %v582, 64
      %v665 = vpop.permute.xlu0 %664
      %666 = vrot.lane.b32.xlu0 %v588, 64
      %v667 = vpop.permute.xlu0 %666
      %668 = vrot.lane.b32.xlu0 %v594, 64
      %v669 = vpop.permute.xlu0 %668
      %670 = vrot.lane.b32.xlu0 %v600, 64
      %v671 = vpop.permute.xlu0 %670
      %672 = vrot.lane.b32.xlu0 %v606, 64
      %v673 = vpop.permute.xlu0 %672
      %vm674 = vcmask 523264
      %v676 = vsel %vm674, %v610, 0
      %v679 = vsel %vm674, %v611, 0
      %v682 = vsel %vm674, %v612, 0
      %v685 = vsel %vm674, %v613, 0
      %v688 = vsel %vm674, %v614, 0
      %v691 = vsel %vm674, %v615, 0
      %v694 = vsel %vm674, %v616, 0
      %v697 = vsel %vm674, %v617, 0
      %v700 = vsel %vm674, %v618, 0
      %v703 = vsel %vm674, %v619, 0
      %v706 = vsel %vm674, %v620, 0
      %v709 = vsel %vm674, %v621, 0
      %v712 = vsel %vm674, %v622, 0
      %v715 = vsel %vm674, %v623, 0
      %v718 = vsel %vm674, %v624, 0
      %v721 = vsel %vm674, %v625, 0
      %v723 = vsel %vm674, %v643, 0
      %v725 = vsel %vm674, %v645, 0
      %v727 = vsel %vm674, %v647, 0
      %v729 = vsel %vm674, %v649, 0
      %v731 = vsel %vm674, %v651, 0
      %v733 = vsel %vm674, %v653, 0
      %v735 = vsel %vm674, %v655, 0
      %v737 = vsel %vm674, %v657, 0
      %v739 = vsel %vm674, %v659, 0
      %v741 = vsel %vm674, %v661, 0
      %v743 = vsel %vm674, %v663, 0
      %v745 = vsel %vm674, %v665, 0
      %v747 = vsel %vm674, %v667, 0
      %v749 = vsel %vm674, %v669, 0
      %v751 = vsel %vm674, %v671, 0
      %v753 = vsel %vm674, %v673, 0
      %755 = vmatprep.subr.mxu0 0.0
      %756 = vmatpush1.xpose.msra.mxu0 %v723
      %757 = vmatprep.subr.mxu0 0.0
      %758 = vmatpush1.xpose.msra.mxu0 %v725
      %759 = vmatprep.subr.mxu0 0.0
      %760 = vmatpush1.xpose.msra.mxu0 %v727
      %761 = vmatprep.subr.mxu0 0.0
      %762 = vmatpush1.xpose.msra.mxu0 %v729
      %763 = vmatprep.subr.mxu0 0.0
      %764 = vmatpush1.xpose.msra.mxu0 %v731
      %765 = vmatprep.subr.mxu0 0.0
      %766 = vmatpush1.xpose.msra.mxu0 %v733
      %767 = vmatprep.subr.mxu0 0.0
      %768 = vmatpush1.xpose.msra.mxu0 %v735
      %769 = vmatprep.subr.mxu0 0.0
      %770 = vmatpush1.xpose.msra.mxu0 %v737
      %771 = vmatprep.subr.mxu0 0.0
      %772 = vmatpush1.xpose.msra.mxu0 %v739
      %773 = vmatprep.subr.mxu0 0.0
      %774 = vmatpush1.xpose.msra.mxu0 %v741
      %775 = vmatprep.subr.mxu0 0.0
      %776 = vmatpush1.xpose.msra.mxu0 %v743
      %777 = vmatprep.subr.mxu0 0.0
      %778 = vmatpush1.xpose.msra.mxu0 %v745
      %779 = vmatprep.subr.mxu0 0.0
      %780 = vmatpush1.xpose.msra.mxu0 %v747
      %781 = vmatprep.subr.mxu0 0.0
      %782 = vmatpush1.xpose.msra.mxu0 %v749
      %783 = vmatprep.subr.mxu0 0.0
      %784 = vmatpush1.xpose.msra.mxu0 %v751
      %785 = vmatprep.subr.mxu0 0.0
      %786 = vmatpush1.xpose.msra.mxu0 %v753
      %787 = vmatprep.subr.mxu0 0.0
      %788 = vmatpush1.xpose.msra.mxu0 0.0
      %789 = vmatprep.subr.mxu0 0.0
      %790 = vmatpush1.xpose.msra.mxu0 0.0
      %791 = vmatprep.subr.mxu0 0.0
      %792 = vmatpush1.xpose.msra.mxu0 0.0
      %793 = vmatprep.subr.mxu0 0.0
      %794 = vmatpush1.xpose.msra.mxu0 0.0
      %795 = vmatprep.subr.mxu0 0.0
      %796 = vmatpush1.xpose.msra.mxu0 0.0
      %797 = vmatprep.subr.mxu0 0.0
      %798 = vmatpush1.xpose.msra.mxu0 0.0
      %799 = vmatprep.subr.mxu0 0.0
      %800 = vmatpush1.xpose.msra.mxu0 0.0
      %801 = vmatprep.subr.mxu0 0.0
      %802 = vmatpush1.xpose.msra.mxu0 0.0
      %803 = vmatprep.subr.mxu0 0.0
      %804 = vmatpush1.xpose.msra.mxu0 0.0
      %805 = vmatprep.subr.mxu0 0.0
      %806 = vmatpush1.xpose.msra.mxu0 0.0
      %807 = vmatprep.subr.mxu0 0.0
      %808 = vmatpush1.xpose.msra.mxu0 0.0
      %809 = vmatprep.subr.mxu0 0.0
      %810 = vmatpush1.xpose.msra.mxu0 0.0
      %811 = vmatprep.subr.mxu0 0.0
      %812 = vmatpush1.xpose.msra.mxu0 0.0
      %813 = vmatprep.subr.mxu0 0.0
      %814 = vmatpush1.xpose.msra.mxu0 0.0
      %815 = vmatprep.subr.mxu0 0.0
      %816 = vmatpush1.xpose.msra.mxu0 0.0
      %817 = vmatprep.subr.mxu0 0.0
      %818 = vmatpush1.xpose.msra.mxu0 0.0
      %819 = vmatprep.mubr.f32.mxu0 0.0
      %820 = vmatmul.mubr.f32.gmra.mrb[0].mxu0 %v676
      %v821 = vpop.f32.mrb[0].mxu0
      %v822 = vadd.f32 0.0, %v821
      %v823 = vpop.f32.mrb[0].mxu0
      %824 = vmatprep.mubr.f32.mxu0 0.0
      %825 = vmatmul.mubr.f32.gmra.mrb[0].mxu0 %v679
      %v826 = vpop.f32.mrb[0].mxu0
      %v827 = vadd.f32 0.0, %v826
      %v828 = vpop.f32.mrb[0].mxu0
      %829 = vmatprep.mubr.f32.mxu0 0.0
      %830 = vmatmul.mubr.f32.gmra.mrb[0].mxu0 %v682
      %v831 = vpop.f32.mrb[0].mxu0
      %v832 = vadd.f32 0.0, %v831
      %v833 = vpop.f32.mrb[0].mxu0
      %834 = vmatprep.mubr.f32.mxu0 0.0
      %835 = vmatmul.mubr.f32.gmra.mrb[0].mxu0 %v685
      %v836 = vpop.f32.mrb[0].mxu0
      %v837 = vadd.f32 0.0, %v836
      %v838 = vpop.f32.mrb[0].mxu0
      %839 = vmatprep.mubr.f32.mxu0 0.0
      %840 = vmatmul.mubr.f32.gmra.mrb[0].mxu0 %v688
      %v841 = vpop.f32.mrb[0].mxu0
      %v842 = vadd.f32 0.0, %v841
      %v843 = vpop.f32.mrb[0].mxu0
      %844 = vmatprep.mubr.f32.mxu0 0.0
      %845 = vmatmul.mubr.f32.gmra.mrb[0].mxu0 %v691
      %v846 = vpop.f32.mrb[0].mxu0
      %v847 = vadd.f32 0.0, %v846
      %v848 = vpop.f32.mrb[0].mxu0
      %849 = vmatprep.mubr.f32.mxu0 0.0
      %850 = vmatmul.mubr.f32.gmra.mrb[0].mxu0 %v694
      %v851 = vpop.f32.mrb[0].mxu0
      %v852 = vadd.f32 0.0, %v851
      %v853 = vpop.f32.mrb[0].mxu0
      %854 = vmatprep.mubr.f32.mxu0 0.0
      %855 = vmatmul.mubr.f32.gmra.mrb[0].mxu0 %v697
      %v856 = vpop.f32.mrb[0].mxu0
      %v857 = vadd.f32 0.0, %v856
      %v858 = vpop.f32.mrb[0].mxu0
      %859 = vmatprep.mubr.f32.mxu0 0.0
      %860 = vmatmul.mubr.f32.gmra.mrb[0].mxu0 %v700
      %v861 = vpop.f32.mrb[0].mxu0
      %v862 = vadd.f32 0.0, %v861
      %v863 = vpop.f32.mrb[0].mxu0
      %864 = vmatprep.mubr.f32.mxu0 0.0
      %865 = vmatmul.mubr.f32.gmra.mrb[0].mxu0 %v703
      %v866 = vpop.f32.mrb[0].mxu0
      %v867 = vadd.f32 0.0, %v866
      %v868 = vpop.f32.mrb[0].mxu0
      %869 = vmatprep.mubr.f32.mxu0 0.0
      %870 = vmatmul.mubr.f32.gmra.mrb[0].mxu0 %v706
      %v871 = vpop.f32.mrb[0].mxu0
      %v872 = vadd.f32 0.0, %v871
      %v873 = vpop.f32.mrb[0].mxu0
      %874 = vmatprep.mubr.f32.mxu0 0.0
      %875 = vmatmul.mubr.f32.gmra.mrb[0].mxu0 %v709
      %v876 = vpop.f32.mrb[0].mxu0
      %v877 = vadd.f32 0.0, %v876
      %v878 = vpop.f32.mrb[0].mxu0
      %879 = vmatprep.mubr.f32.mxu0 0.0
      %880 = vmatmul.mubr.f32.gmra.mrb[0].mxu0 %v712
      %v881 = vpop.f32.mrb[0].mxu0
      %v882 = vadd.f32 0.0, %v881
      %v883 = vpop.f32.mrb[0].mxu0
      %884 = vmatprep.mubr.f32.mxu0 0.0
      %885 = vmatmul.mubr.f32.gmra.mrb[0].mxu0 %v715
      %v886 = vpop.f32.mrb[0].mxu0
      %v887 = vadd.f32 0.0, %v886
      %v888 = vpop.f32.mrb[0].mxu0
      %889 = vmatprep.mubr.f32.mxu0 0.0
      %890 = vmatmul.mubr.f32.gmra.mrb[0].mxu0 %v718
      %v891 = vpop.f32.mrb[0].mxu0
      %v892 = vadd.f32 0.0, %v891
      %v893 = vpop.f32.mrb[0].mxu0
      %894 = vmatprep.mubr.f32.mxu0 0.0
      %895 = vmatmul.mubr.f32.gmra.mrb[0].mxu0 %v721
      %v896 = vpop.f32.mrb[0].mxu0
      %v897 = vadd.f32 0.0, %v896
      %v898 = vpop.f32.mrb[0].mxu0
      %899 = vdwg.mxu0
      %v900 = vlaneseq
      %v901 = vshrl.u32 %v900, 7
      %v902 = vadd.s32 %v901, 8
      %v903 = vadd.s32 %v901, 16
      %v904 = vadd.s32 %v901, 24
      %v905 = vadd.s32 %v901, 32
      %v906 = vadd.s32 %v901, 40
      %v907 = vadd.s32 %v901, 48
      %v908 = vadd.s32 %v901, 56
      %v909 = vadd.s32 %v901, 64
      %v910 = vadd.s32 %v901, 72
      %v911 = vadd.s32 %v901, 80
      %v912 = vadd.s32 %v901, 88
      %v913 = vadd.s32 %v901, 96
      %v914 = vadd.s32 %v901, 104
      %v915 = vadd.s32 %v901, 112
      %v916 = vadd.s32 %v901, 120
      %v917 = vlaneseq
      %v918 = vand.u32 %v917, 127
      %vm919 = vcmp.le.s32.totalorder %v918, %v901
      %vm920 = vcmp.le.s32.totalorder %v918, %v902
      %vm921 = vcmp.le.s32.totalorder %v918, %v903
      %vm922 = vcmp.le.s32.totalorder %v918, %v904
      %vm923 = vcmp.le.s32.totalorder %v918, %v905
      %vm924 = vcmp.le.s32.totalorder %v918, %v906
      %vm925 = vcmp.le.s32.totalorder %v918, %v907
      %vm926 = vcmp.le.s32.totalorder %v918, %v908
      %vm927 = vcmp.le.s32.totalorder %v918, %v909
      %vm928 = vcmp.le.s32.totalorder %v918, %v910
      %vm929 = vcmp.le.s32.totalorder %v918, %v911
      %vm930 = vcmp.le.s32.totalorder %v918, %v912
      %vm931 = vcmp.le.s32.totalorder %v918, %v913
      %vm932 = vcmp.le.s32.totalorder %v918, %v914
      %vm933 = vcmp.le.s32.totalorder %v918, %v915
      %vm934 = vcmp.le.s32.totalorder %v918, %v916
      %v935 = vsel %vm919, %v822, -1e+30
      %v936 = vsel %vm920, %v827, -1e+30
      %v937 = vsel %vm921, %v832, -1e+30
      %v938 = vsel %vm922, %v837, -1e+30
      %v939 = vsel %vm923, %v842, -1e+30
      %v940 = vsel %vm924, %v847, -1e+30
      %v941 = vsel %vm925, %v852, -1e+30
      %v942 = vsel %vm926, %v857, -1e+30
      %v943 = vsel %vm927, %v862, -1e+30
      %v944 = vsel %vm928, %v867, -1e+30
      %v945 = vsel %vm929, %v872, -1e+30
      %v946 = vsel %vm930, %v877, -1e+30
      %v947 = vsel %vm931, %v882, -1e+30
      %v948 = vsel %vm932, %v887, -1e+30
      %v949 = vsel %vm933, %v892, -1e+30
      %v950 = vsel %vm934, %v897, -1e+30
      %951 = vmax.xlane.f32.xlu0 %v935
      %v952 = vpop.xlane.xlu0 %951
      %953 = vmax.xlane.f32.xlu0 %v936
      %v954 = vpop.xlane.xlu0 %953
      %955 = vmax.xlane.f32.xlu0 %v937
      %v956 = vpop.xlane.xlu0 %955
      %957 = vmax.xlane.f32.xlu0 %v938
      %v958 = vpop.xlane.xlu0 %957
      %959 = vmax.xlane.f32.xlu0 %v939
      %v960 = vpop.xlane.xlu0 %959
      %961 = vmax.xlane.f32.xlu0 %v940
      %v962 = vpop.xlane.xlu0 %961
      %963 = vmax.xlane.f32.xlu0 %v941
      %v964 = vpop.xlane.xlu0 %963
      %965 = vmax.xlane.f32.xlu0 %v942
      %v966 = vpop.xlane.xlu0 %965
      %967 = vmax.xlane.f32.xlu0 %v943
      %v968 = vpop.xlane.xlu0 %967
      %969 = vmax.xlane.f32.xlu0 %v944
      %v970 = vpop.xlane.xlu0 %969
      %971 = vmax.xlane.f32.xlu0 %v945
      %v972 = vpop.xlane.xlu0 %971
      %973 = vmax.xlane.f32.xlu0 %v946
      %v974 = vpop.xlane.xlu0 %973
      %975 = vmax.xlane.f32.xlu0 %v947
      %v976 = vpop.xlane.xlu0 %975
      %977 = vmax.xlane.f32.xlu0 %v948
      %v978 = vpop.xlane.xlu0 %977
      %979 = vmax.xlane.f32.xlu0 %v949
      %v980 = vpop.xlane.xlu0 %979
      %981 = vmax.xlane.f32.xlu0 %v950
      %v982 = vpop.xlane.xlu0 %981
      %v983 = vsub.f32 %v935, %v952
      %v984 = vsub.f32 %v936, %v954
      %v985 = vsub.f32 %v937, %v956
      %v986 = vsub.f32 %v938, %v958
      %v987 = vsub.f32 %v939, %v960
      %v988 = vsub.f32 %v940, %v962
      %v989 = vsub.f32 %v941, %v964
      %v990 = vsub.f32 %v942, %v966
      %v991 = vsub.f32 %v943, %v968
      %v992 = vsub.f32 %v944, %v970
      %v993 = vsub.f32 %v945, %v972
      %v994 = vsub.f32 %v946, %v974
      %v995 = vsub.f32 %v947, %v976
      %v996 = vsub.f32 %v948, %v978
      %v997 = vsub.f32 %v949, %v980
      %v998 = vsub.f32 %v950, %v982
      %v999 = vmul.f32 %v983, 1.442695
      %v1000 = vpow.pop %v999
      %v1001 = vmul.f32 %v984, 1.442695
      %v1002 = vpow.pop %v1001
      %v1003 = vmul.f32 %v985, 1.442695
      %v1004 = vpow.pop %v1003
      %v1005 = vmul.f32 %v986, 1.442695
      %v1006 = vpow.pop %v1005
      %v1007 = vmul.f32 %v987, 1.442695
      %v1008 = vpow.pop %v1007
      %v1009 = vmul.f32 %v988, 1.442695
      %v1010 = vpow.pop %v1009
      %v1011 = vmul.f32 %v989, 1.442695
      %v1012 = vpow.pop %v1011
      %v1013 = vmul.f32 %v990, 1.442695
      %v1014 = vpow.pop %v1013
      %v1015 = vmul.f32 %v991, 1.442695
      %v1016 = vpow.pop %v1015
      %v1017 = vmul.f32 %v992, 1.442695
      %v1018 = vpow.pop %v1017
      %v1019 = vmul.f32 %v993, 1.442695
      %v1020 = vpow.pop %v1019
      %v1021 = vmul.f32 %v994, 1.442695
      %v1022 = vpow.pop %v1021
      %v1023 = vmul.f32 %v995, 1.442695
      %v1024 = vpow.pop %v1023
      %v1025 = vmul.f32 %v996, 1.442695
      %v1026 = vpow.pop %v1025
      %v1027 = vmul.f32 %v997, 1.442695
      %v1028 = vpow.pop %v1027
      %v1029 = vmul.f32 %v998, 1.442695
      %v1030 = vpow.pop %v1029
      %1031 = vadd.xlane.f32.xlu0 %v1000
      %v1032 = vpop.xlane.xlu0 %1031
      %1033 = vadd.xlane.f32.xlu0 %v1002
      %v1034 = vpop.xlane.xlu0 %1033
      %1035 = vadd.xlane.f32.xlu0 %v1004
      %v1036 = vpop.xlane.xlu0 %1035
      %1037 = vadd.xlane.f32.xlu0 %v1006
      %v1038 = vpop.xlane.xlu0 %1037
      %1039 = vadd.xlane.f32.xlu0 %v1008
      %v1040 = vpop.xlane.xlu0 %1039
      %1041 = vadd.xlane.f32.xlu0 %v1010
      %v1042 = vpop.xlane.xlu0 %1041
      %1043 = vadd.xlane.f32.xlu0 %v1012
      %v1044 = vpop.xlane.xlu0 %1043
      %1045 = vadd.xlane.f32.xlu0 %v1014
      %v1046 = vpop.xlane.xlu0 %1045
      %1047 = vadd.xlane.f32.xlu0 %v1016
      %v1048 = vpop.xlane.xlu0 %1047
      %1049 = vadd.xlane.f32.xlu0 %v1018
      %v1050 = vpop.xlane.xlu0 %1049
      %1051 = vadd.xlane.f32.xlu0 %v1020
      %v1052 = vpop.xlane.xlu0 %1051
      %1053 = vadd.xlane.f32.xlu0 %v1022
      %v1054 = vpop.xlane.xlu0 %1053
      %1055 = vadd.xlane.f32.xlu0 %v1024
      %v1056 = vpop.xlane.xlu0 %1055
      %1057 = vadd.xlane.f32.xlu0 %v1026
      %v1058 = vpop.xlane.xlu0 %1057
      %1059 = vadd.xlane.f32.xlu0 %v1028
      %v1060 = vpop.xlane.xlu0 %1059
      %1061 = vadd.xlane.f32.xlu0 %v1030
      %v1062 = vpop.xlane.xlu0 %1061
      %1063 = vmatprep.subr.mxu0 0.0
      %1064 = vmatpush1.msra.mxu0 %v518
      %1065 = vmatprep.subr.mxu0 0.0
      %1066 = vmatpush1.msra.mxu0 %v524
      %1067 = vmatprep.subr.mxu0 0.0
      %1068 = vmatpush1.msra.mxu0 %v530
      %1069 = vmatprep.subr.mxu0 0.0
      %1070 = vmatpush1.msra.mxu0 %v536
      %1071 = vmatprep.subr.mxu0 0.0
      %1072 = vmatpush1.msra.mxu0 %v542
      %1073 = vmatprep.subr.mxu0 0.0
      %1074 = vmatpush1.msra.mxu0 %v548
      %1075 = vmatprep.subr.mxu0 0.0
      %1076 = vmatpush1.msra.mxu0 %v554
      %1077 = vmatprep.subr.mxu0 0.0
      %1078 = vmatpush1.msra.mxu0 %v560
      %1079 = vmatprep.subr.mxu0 0.0
      %1080 = vmatpush1.msra.mxu0 %v566
      %1081 = vmatprep.subr.mxu0 0.0
      %1082 = vmatpush1.msra.mxu0 %v572
      %1083 = vmatprep.subr.mxu0 0.0
      %1084 = vmatpush1.msra.mxu0 %v578
      %1085 = vmatprep.subr.mxu0 0.0
      %1086 = vmatpush1.msra.mxu0 %v584
      %1087 = vmatprep.subr.mxu0 0.0
      %1088 = vmatpush1.msra.mxu0 %v590
      %1089 = vmatprep.subr.mxu0 0.0
      %1090 = vmatpush1.msra.mxu0 %v596
      %1091 = vmatprep.subr.mxu0 0.0
      %1092 = vmatpush1.msra.mxu0 %v602
      %1093 = vmatprep.subr.mxu0 0.0
      %1094 = vmatpush1.msra.mxu0 %v608
      %1095 = vmatprep.subr.mxu0 0.0
      %1096 = vmatpush1.msra.mxu0 0.0
      %1097 = vmatprep.subr.mxu0 0.0
      %1098 = vmatpush1.msra.mxu0 0.0
      %1099 = vmatprep.subr.mxu0 0.0
      %1100 = vmatpush1.msra.mxu0 0.0
      %1101 = vmatprep.subr.mxu0 0.0
      %1102 = vmatpush1.msra.mxu0 0.0
      %1103 = vmatprep.subr.mxu0 0.0
      %1104 = vmatpush1.msra.mxu0 0.0
      %1105 = vmatprep.subr.mxu0 0.0
      %1106 = vmatpush1.msra.mxu0 0.0
      %1107 = vmatprep.subr.mxu0 0.0
      %1108 = vmatpush1.msra.mxu0 0.0
      %1109 = vmatprep.subr.mxu0 0.0
      %1110 = vmatpush1.msra.mxu0 0.0
      %1111 = vmatprep.subr.mxu0 0.0
      %1112 = vmatpush1.msra.mxu0 0.0
      %1113 = vmatprep.subr.mxu0 0.0
      %1114 = vmatpush1.msra.mxu0 0.0
      %1115 = vmatprep.subr.mxu0 0.0
      %1116 = vmatpush1.msra.mxu0 0.0
      %1117 = vmatprep.subr.mxu0 0.0
      %1118 = vmatpush1.msra.mxu0 0.0
      %1119 = vmatprep.subr.mxu0 0.0
      %1120 = vmatpush1.msra.mxu0 0.0
      %1121 = vmatprep.subr.mxu0 0.0
      %1122 = vmatpush1.msra.mxu0 0.0
      %1123 = vmatprep.subr.mxu0 0.0
      %1124 = vmatpush1.msra.mxu0 0.0
      %1125 = vmatprep.subr.mxu0 0.0
      %1126 = vmatpush1.msra.mxu0 0.0
      %1127 = vmatprep.mubr.f32.mxu0 0.0
      %1128 = vmatmul.mubr.f32.gmra.mrb[0].mxu0 %v1000
      %v1129 = vpop.f32.mrb[0].mxu0
      %v1130 = vadd.f32 0.0, %v1129
      %v1131 = vpop.f32.mrb[0].mxu0
      %1132 = vmatprep.mubr.f32.mxu0 0.0
      %1133 = vmatmul.mubr.f32.gmra.mrb[0].mxu0 %v1002
      %v1134 = vpop.f32.mrb[0].mxu0
      %v1135 = vadd.f32 0.0, %v1134
      %v1136 = vpop.f32.mrb[0].mxu0
      %1137 = vmatprep.mubr.f32.mxu0 0.0
      %1138 = vmatmul.mubr.f32.gmra.mrb[0].mxu0 %v1004
      %v1139 = vpop.f32.mrb[0].mxu0
      %v1140 = vadd.f32 0.0, %v1139
      %v1141 = vpop.f32.mrb[0].mxu0
      %1142 = vmatprep.mubr.f32.mxu0 0.0
      %1143 = vmatmul.mubr.f32.gmra.mrb[0].mxu0 %v1006
      %v1144 = vpop.f32.mrb[0].mxu0
      %v1145 = vadd.f32 0.0, %v1144
      %v1146 = vpop.f32.mrb[0].mxu0
      %1147 = vmatprep.mubr.f32.mxu0 0.0
      %1148 = vmatmul.mubr.f32.gmra.mrb[0].mxu0 %v1008
      %v1149 = vpop.f32.mrb[0].mxu0
      %v1150 = vadd.f32 0.0, %v1149
      %v1151 = vpop.f32.mrb[0].mxu0
      %1152 = vmatprep.mubr.f32.mxu0 0.0
      %1153 = vmatmul.mubr.f32.gmra.mrb[0].mxu0 %v1010
      %v1154 = vpop.f32.mrb[0].mxu0
      %v1155 = vadd.f32 0.0, %v1154
      %v1156 = vpop.f32.mrb[0].mxu0
      %1157 = vmatprep.mubr.f32.mxu0 0.0
      %1158 = vmatmul.mubr.f32.gmra.mrb[0].mxu0 %v1012
      %v1159 = vpop.f32.mrb[0].mxu0
      %v1160 = vadd.f32 0.0, %v1159
      %v1161 = vpop.f32.mrb[0].mxu0
      %1162 = vmatprep.mubr.f32.mxu0 0.0
      %1163 = vmatmul.mubr.f32.gmra.mrb[0].mxu0 %v1014
      %v1164 = vpop.f32.mrb[0].mxu0
      %v1165 = vadd.f32 0.0, %v1164
      %v1166 = vpop.f32.mrb[0].mxu0
      %1167 = vmatprep.mubr.f32.mxu0 0.0
      %1168 = vmatmul.mubr.f32.gmra.mrb[0].mxu0 %v1016
      %v1169 = vpop.f32.mrb[0].mxu0
      %v1170 = vadd.f32 0.0, %v1169
      %v1171 = vpop.f32.mrb[0].mxu0
      %1172 = vmatprep.mubr.f32.mxu0 0.0
      %1173 = vmatmul.mubr.f32.gmra.mrb[0].mxu0 %v1018
      %v1174 = vpop.f32.mrb[0].mxu0
      %v1175 = vadd.f32 0.0, %v1174
      %v1176 = vpop.f32.mrb[0].mxu0
      %1177 = vmatprep.mubr.f32.mxu0 0.0
      %1178 = vmatmul.mubr.f32.gmra.mrb[0].mxu0 %v1020
      %v1179 = vpop.f32.mrb[0].mxu0
      %v1180 = vadd.f32 0.0, %v1179
      %v1181 = vpop.f32.mrb[0].mxu0
      %1182 = vmatprep.mubr.f32.mxu0 0.0
      %1183 = vmatmul.mubr.f32.gmra.mrb[0].mxu0 %v1022
      %v1184 = vpop.f32.mrb[0].mxu0
      %v1185 = vadd.f32 0.0, %v1184
      %v1186 = vpop.f32.mrb[0].mxu0
      %1187 = vmatprep.mubr.f32.mxu0 0.0
      %1188 = vmatmul.mubr.f32.gmra.mrb[0].mxu0 %v1024
      %v1189 = vpop.f32.mrb[0].mxu0
      %v1190 = vadd.f32 0.0, %v1189
      %v1191 = vpop.f32.mrb[0].mxu0
      %1192 = vmatprep.mubr.f32.mxu0 0.0
      %1193 = vmatmul.mubr.f32.gmra.mrb[0].mxu0 %v1026
      %v1194 = vpop.f32.mrb[0].mxu0
      %v1195 = vadd.f32 0.0, %v1194
      %v1196 = vpop.f32.mrb[0].mxu0
      %1197 = vmatprep.mubr.f32.mxu0 0.0
      %1198 = vmatmul.mubr.f32.gmra.mrb[0].mxu0 %v1028
      %v1199 = vpop.f32.mrb[0].mxu0
      %v1200 = vadd.f32 0.0, %v1199
      %v1201 = vpop.f32.mrb[0].mxu0
      %1202 = vmatprep.mubr.f32.mxu0 0.0
      %1203 = vmatmul.mubr.f32.gmra.mrb[0].mxu0 %v1030
      %v1204 = vpop.f32.mrb[0].mxu0
      %v1205 = vadd.f32 0.0, %v1204
      %v1206 = vpop.f32.mrb[0].mxu0
      %1207 = vdwg.mxu0
      %v1208 = vrcp.pop %v1032
      %v1209 = vrcp.pop %v1034
      %v1210 = vrcp.pop %v1036
      %v1211 = vrcp.pop %v1038
      %v1212 = vrcp.pop %v1040
      %v1213 = vrcp.pop %v1042
      %v1214 = vrcp.pop %v1044
      %v1215 = vrcp.pop %v1046
      %v1216 = vrcp.pop %v1048
      %v1217 = vrcp.pop %v1050
      %v1218 = vrcp.pop %v1052
      %v1219 = vrcp.pop %v1054
      %v1220 = vrcp.pop %v1056
      %v1221 = vrcp.pop %v1058
      %v1222 = vrcp.pop %v1060
      %v1223 = vrcp.pop %v1062
      %v1224 = vmul.f32 %v1130, %v1208
      %v1225 = vmul.f32 %v1135, %v1209
      %v1226 = vmul.f32 %v1140, %v1210
      %v1227 = vmul.f32 %v1145, %v1211
      %v1228 = vmul.f32 %v1150, %v1212
      %v1229 = vmul.f32 %v1155, %v1213
      %v1230 = vmul.f32 %v1160, %v1214
      %v1231 = vmul.f32 %v1165, %v1215
      %v1232 = vmul.f32 %v1170, %v1216
      %v1233 = vmul.f32 %v1175, %v1217
      %v1234 = vmul.f32 %v1180, %v1218
      %v1235 = vmul.f32 %v1185, %v1219
      %v1236 = vmul.f32 %v1190, %v1220
      %v1237 = vmul.f32 %v1195, %v1221
      %v1238 = vmul.f32 %v1200, %v1222
      %v1239 = vmul.f32 %v1205, %v1223
      %1240 = vst.msk [vmem:[%s143] sm:$0xff] %vm674, %v1224
      %1241 = vst.msk [vmem:[%s143 + $0x8] sm:$0xff] %vm674, %v1225
      %1242 = vst.msk [vmem:[%s143 + $0x10] sm:$0xff] %vm674, %v1226
      %1243 = vst.msk [vmem:[%s143 + $0x18] sm:$0xff] %vm674, %v1227
      %1244 = vst.msk [vmem:[%s143 + $0x20] sm:$0xff] %vm674, %v1228
      %1245 = vst.msk [vmem:[%s143 + $0x28] sm:$0xff] %vm674, %v1229
      %1246 = vst.msk [vmem:[%s143 + $0x30] sm:$0xff] %vm674, %v1230
      %1247 = vst.msk [vmem:[%s143 + $0x38] sm:$0xff] %vm674, %v1231
      %1248 = vst.msk [vmem:[%s143 + $0x40] sm:$0xff] %vm674, %v1232
      %1249 = vst.msk [vmem:[%s143 + $0x48] sm:$0xff] %vm674, %v1233
      %1250 = vst.msk [vmem:[%s143 + $0x50] sm:$0xff] %vm674, %v1234
      %1251 = vst.msk [vmem:[%s143 + $0x58] sm:$0xff] %vm674, %v1235
      %1252 = vst.msk [vmem:[%s143 + $0x60] sm:$0xff] %vm674, %v1236
      %1253 = vst.msk [vmem:[%s143 + $0x68] sm:$0xff] %vm674, %v1237
      %1254 = vst.msk [vmem:[%s143 + $0x70] sm:$0xff] %vm674, %v1238
      %1255 = vst.msk [vmem:[%s143 + $0x78] sm:$0xff] %vm674, %v1239
      %p1256 = scmp.lt.s32.totalorder %s13, 1
      %s1257 = scalar_select %p1256, %s13, 1
      %s1258 = smul.addr %s1257, 16
      %s1259 = smul.addr %s1258, 8
      %s1260 = scalar_lea.vmem %s2, %s1259
      // Predicated region
      $region29: #{tpu_custom_call.1} parent=27 // pred_check
        %p1261 = pneg %p78
      $region30: #{tpu_custom_call.1} parent=27 // pred_check_branch
        %1263 = sbr.rel (%p1261) target = $region32
      $region31: #{tpu_custom_call.1} parent=27 // pred_region
        _
      $region32: #{tpu_custom_call.1} parent=27 // pred_fallthru
        _
    $region28: #{tpu_custom_call.1} parent=5 // pred_fallthru
      _
    %p1264 = scmp.le.s32.totalorder 2, %s8
    // Predicated region
    $region33: #{tpu_custom_call.1} parent=5 // pred_check
      %p1265 = pneg %p1264
    $region34: #{tpu_custom_call.1} parent=5 // pred_check_branch
      %1267 = sbr.rel (%p1265) target = $region36
    $region35: #{tpu_custom_call.1} parent=5 // pred_region
      %s1268 = ssub.s32 %s8, 2
      // Predicated region
      $region37: #{tpu_custom_call.1} parent=35 // pred_check
        %p1269 = pneg %p84
      $region38: #{tpu_custom_call.1} parent=35 // pred_check_branch
        %1271 = sbr.rel (%p1269) target = $region40
      $region39: #{tpu_custom_call.1} parent=35 // pred_region
        %p1272 = scmp.lt.s32.totalorder %s14, 1
        %s1273 = scalar_select %p1272, %s14, 1
        %s1274 = smul.addr %s1273, 16
        %s1275 = smul.addr %s1274, 8
        %s1276 = scalar_lea.vmem %s2, %s1275
      $region40: #{tpu_custom_call.1} parent=35 // pred_fallthru
        _
    $region36: #{tpu_custom_call.1} parent=5 // pred_fallthru
      _
  $region6: #{tpu_custom_call.1} parent=0 // loop_footer
    %s12 = sadd.s32 1, %s8
  $region7: #{tpu_custom_call.1} parent=0 // loop_footer_branch
    %7 = sbr.rel target = $region3
  $region8: #{tpu_custom_call.1} parent=0 // loop_exit
    _

</llo_original>
